<compile_context>
chip_gen: v7x
topology: tpu7x:2x2x1
jax: 0.10.0
libtpu: 0.0.40
codegen_flags: <defaults>
</compile_context>

<pallas_src>
import functools

import jax
import jax.numpy as jnp
from jax.experimental import pallas as pl
from jax.experimental.pallas import tpu as pltpu


def _attention_kernel(h_ref, v_ref, o_ref):
    # h_ref : (Bt, L, K)  encoder outputs for this batch group (K = 2H)
    # v_ref : (1, K)      fused projection vector  W1[H:] @ w2   (f32, resident)
    # o_ref : (Bt, L)     softmax attention weights, lane-dense in L (f32)
    h = h_ref[...].astype(jnp.float32)                 # (Bt, L, K)
    # Fused "two Linears" == a single dot with v: VPU multiply + lane reduce.
    e = jnp.sum(h * v_ref[...], axis=-1)               # (Bt, L)

    # Softmax over the source-length axis (torch dim=1), exact normalization.
    m = jnp.max(e, axis=-1, keepdims=True)
    p = jnp.exp(e - m)
    denom = jnp.sum(p, axis=-1, keepdims=True)
    o_ref[...] = (p / denom).astype(o_ref.dtype)


def _tpu_vmem_capacity_bytes():
    """Physical VMEM per core; conservative (v7x-sized) fallback."""
    try:
        return int(pltpu.get_tpu_info().vmem_capacity_bytes)
    except Exception:
        return 64 << 20


def _pick_block_b(batch, per_batch_bytes, budget_bytes):
    """Largest divisor of `batch` that
       (a) keeps the output block sublane-aligned (d % 8 == 0 or d == batch),
       (b) keeps the double-buffered h block within the VMEM budget,
       (c) prefers >= 4 (even) grid steps, then >= 2, for v7x's 2 TensorCores.
    """
    divisors = [d for d in range(1, batch + 1) if batch % d == 0]
    aligned = [d for d in divisors if d % 8 == 0 or d == batch]
    feasible = [d for d in aligned if 2 * d * per_batch_bytes <= budget_bytes]
    if not feasible:
        feasible = [min(aligned)]
    best4 = [d for d in feasible if (batch // d) >= 4 and (batch // d) % 2 == 0]
    best2 = [d for d in feasible if (batch // d) >= 2]
    return max(best4 or best2 or feasible)


@functools.partial(jax.jit, static_argnames=("stream_dtype",))
def attention_forward(s, h, w1, b1, w2, b2, *, stream_dtype=jnp.bfloat16):
    """s: (B, 1, H), h: (B, L, 2H). Returns attention weights (B, L).

    w1: (3H, H), b1: (H,), w2: (H, 1), b2: (1,)  (weights stored transposed
    relative to torch's (out, in) convention).
    """
    B, _, H = s.shape
    L = h.shape[1]
    K = h.shape[2]                      # 2H for a bidirectional encoder
    assert w1.shape == (H + K, H), (w1.shape, H, K)

    # Fuse the two Linears:  v = W1[H:] @ w2  (the s-term and both biases are
    # constant over L and cancel exactly in the softmax over L).
    v = (w1[H:].astype(jnp.float32) @ w2.astype(jnp.float32)).reshape(1, K)

    h_in = h if stream_dtype is None else h.astype(stream_dtype)
    itemsize = jnp.dtype(h_in.dtype).itemsize

    # Generation-aware VMEM budget for the double-buffered h input block:
    # v5e/v6e have 128 MiB VMEM, v7x only 64 MiB.
    cap = _tpu_vmem_capacity_bytes()
    budget = (24 << 20) if cap >= (100 << 20) else (12 << 20)

    per_batch_bytes = L * K * itemsize
    block_b = _pick_block_b(B, per_batch_bytes, budget)
    grid = (B // block_b,)

    # Rough VMEM accounting (double-buffered h + out, f32 promoted block,
    # resident v) -> explicit limit with headroom, capped below physical.
    in_block = block_b * L * K * itemsize
    out_block = block_b * L * 4
    est = 2 * in_block + 2 * out_block + block_b * L * K * 4 + 2 * K * 4 + (1 << 20)
    vmem_limit = int(min(max(est + (8 << 20), 32 << 20),
                         max(cap - (8 << 20), 32 << 20)))

    cost = pl.CostEstimate(
        flops=2 * B * L * K + 5 * B * L,
        transcendentals=B * L,
        bytes_accessed=h_in.size * itemsize + v.size * 4 + B * L * 4,
    )

    out = pl.pallas_call(
        _attention_kernel,
        out_shape=jax.ShapeDtypeStruct((B, L), jnp.float32),
        grid=grid,
        in_specs=[
            pl.BlockSpec((block_b, L, K), lambda b: (b, 0, 0)),
            pl.BlockSpec((1, K), lambda b: (0, 0)),        # tiny resident vector
        ],
        out_specs=pl.BlockSpec((block_b, L), lambda b: (b, 0)),
        compiler_params=pltpu.CompilerParams(
            dimension_semantics=("parallel",),
            vmem_limit_bytes=vmem_limit,
        ),
        cost_estimate=cost,
    )(h_in, v)

    return out  # (B, L)


def _reference(s, h, w1, b1, w2, b2):
    """Pure-JAX transcription of the PyTorch module."""
    B, _, H = s.shape
    L = h.shape[1]
    x = jnp.concatenate([jnp.broadcast_to(s, (B, L, H)), h], axis=2)
    e = x @ w1 + b1          # (B, L, H)
    e = e @ w2 + b2          # (B, L, 1)
    return jax.nn.softmax(e, axis=1)[..., 0]


if __name__ == "__main__":
    B, L, H = 2, 8, 32  # batch, source length, hid_size

    key = jax.random.PRNGKey(0)
    ks, kh, kw1, kb1, kw2, kb2 = jax.random.split(key, 6)

    # Inputs consistent with the forward: s is (B,1,H), h is (B,L,2H)
    s = jax.random.normal(ks, (B, 1, H), dtype=jnp.float32)
    h = jax.random.normal(kh, (B, L, 2 * H), dtype=jnp.float32)

    # Parameters (shapes from nn.Linear(3H,H), nn.Linear(H,1));
    # stored transposed relative to torch's (out, in) convention.
    w1 = jax.random.normal(kw1, (3 * H, H), dtype=jnp.float32) * 0.1
    b1 = jax.random.normal(kb1, (H,), dtype=jnp.float32) * 0.1
    w2 = jax.random.normal(kw2, (H, 1), dtype=jnp.float32) * 0.1
    b2 = jax.random.normal(kb2, (1,), dtype=jnp.float32) * 0.1

    a_ref = _reference(s, h, w1, b1, w2, b2)

    # Default path: bf16-streamed h, f32 accumulation / softmax.
    a = attention_forward(s, h, w1, b1, w2, b2)
    a = jax.block_until_ready(a)
    assert a.shape == (B, L), a.shape
    assert jnp.allclose(a, a_ref, atol=2e-2, rtol=2e-2), "bf16 mismatch vs reference"
    assert jnp.allclose(jnp.sum(a, axis=1), 1.0, atol=1e-4), "softmax rows must sum to 1"

    # Full-precision streaming path, tight tolerance.
    a32 = attention_forward(s, h, w1, b1, w2, b2, stream_dtype=None)
    a32 = jax.block_until_ready(a32)
    assert jnp.allclose(a32, a_ref, atol=1e-3, rtol=1e-3), "f32 mismatch vs reference"
    assert jnp.allclose(jnp.sum(a32, axis=1), 1.0, atol=1e-4), "softmax rows must sum to 1"

    print("KERNEL_OK")
</pallas_src>

<mosaic_0001>
module attributes {stable_mosaic.version = 11 : i64} {
  func.func @_attention_kernel(%arg0: i32, %arg1: memref<2x8x64xbf16, #tpu.memory_space<vmem>>, %arg2: memref<1x64xf32, #tpu.memory_space<vmem>>, %arg3: memref<2x8xf32, #tpu.memory_space<vmem>>) attributes {dimension_semantics = [#tpu.dimension_semantics<parallel>], iteration_bounds = array<i64: 1>, scalar_prefetch = 0 : i64, scratch_operands = 0 : i64, tpu.core_type = #tpu.core_type<tc>, window_params = [{transform_indices = @transform_0, window_bounds = array<i64: 2, 8, 64>}, {pipeline_mode = #tpu.pipeline_mode<synchronous>, transform_indices = @transform_1, window_bounds = array<i64: 1, 64>}, {transform_indices = @transform_2, window_bounds = array<i64: 2, 8>}]} {
    %c0 = arith.constant 0 : index
    %c0_0 = arith.constant 0 : index
    %c0_1 = arith.constant 0 : index
    %0 = vector.load %arg1[%c0, %c0_0, %c0_1] : memref<2x8x64xbf16, #tpu.memory_space<vmem>>, vector<2x8x64xbf16>
    %1 = arith.extf %0 : vector<2x8x64xbf16> to vector<2x8x64xf32>
    %c0_2 = arith.constant 0 : index
    %c0_3 = arith.constant 0 : index
    %2 = vector.load %arg2[%c0_2, %c0_3] : memref<1x64xf32, #tpu.memory_space<vmem>>, vector<1x64xf32>
    %3 = vector.shape_cast %2 : vector<1x64xf32> to vector<1x1x64xf32>
    %4 = vector.broadcast %3 : vector<1x1x64xf32> to vector<2x8x64xf32>
    %5 = arith.mulf %1, %4 : vector<2x8x64xf32>
    %cst = arith.constant dense<0.000000e+00> : vector<2x8xf32>
    %6 = vector.multi_reduction <add>, %5, %cst [2] : vector<2x8x64xf32> to vector<2x8xf32>
    %cst_4 = arith.constant dense<0xFF800000> : vector<2xf32>
    %7 = vector.multi_reduction <maximumf>, %6, %cst_4 [1] : vector<2x8xf32> to vector<2xf32>
    %8 = vector.shape_cast %7 : vector<2xf32> to vector<2x1xf32>
    %9 = vector.broadcast %8 : vector<2x1xf32> to vector<2x8xf32>
    %10 = arith.subf %6, %9 : vector<2x8xf32>
    %11 = math.exp %10 : vector<2x8xf32>
    %cst_5 = arith.constant dense<0.000000e+00> : vector<2xf32>
    %12 = vector.multi_reduction <add>, %11, %cst_5 [1] : vector<2x8xf32> to vector<2xf32>
    %13 = vector.shape_cast %12 : vector<2xf32> to vector<2x1xf32>
    %14 = vector.broadcast %13 : vector<2x1xf32> to vector<2x8xf32>
    %15 = arith.divf %11, %14 : vector<2x8xf32>
    %c0_6 = arith.constant 0 : index
    %c0_7 = arith.constant 0 : index
    %16 = vector.load %arg3[%c0_6, %c0_7] : memref<2x8xf32, #tpu.memory_space<vmem>>, vector<2x8xf32>
    tpu.vector_store %arg3[%c0_6, %c0_7], %15 {strides = array<i32>} : memref<2x8xf32, #tpu.memory_space<vmem>>, vector<2x8xf32>,
    return
  }
  func.func @transform_0(%arg0: i32) -> (i32, i32, i32) {
    %c0_i32 = arith.constant 0 : i32
    %c0_i32_0 = arith.constant 0 : i32
    %c0_i32_1 = arith.constant 0 : i32
    return %arg0, %c0_i32, %c0_i32_0 : i32, i32, i32
  }
  func.func @transform_1(%arg0: i32) -> (i32, i32) {
    %c0_i32 = arith.constant 0 : i32
    %c0_i32_0 = arith.constant 0 : i32
    %c0_i32_1 = arith.constant 0 : i32
    return %c0_i32, %c0_i32_0 : i32, i32
  }
  func.func @transform_2(%arg0: i32) -> (i32, i32) {
    %c0_i32 = arith.constant 0 : i32
    %c0_i32_0 = arith.constant 0 : i32
    return %arg0, %c0_i32 : i32, i32
  }
}

</mosaic_0001>

<llo_original>
// kernel: attention_forward.1
$region0: #{attention_forward.1}
  #allocation0 [shape = 'u32[]', space=smem, size = 0x4, offset = 0x4, fixed_abs, tag = 'smem constant byte address 0x4 - core index']
  #allocation1 [shape = 'u32[144,128]{1,0:T(1,128)}', space=vmem, size = 0x12000, scoped, tag = 'internal scratch']
  %s0 = inlined_call_operand.vmem [shape: bf16[2,8,64], index: 0, kind: input, shape index: {}]
  %s1 = inlined_call_operand.vmem [shape: f32[1,64], index: 1, kind: input, shape index: {}]
  %s2 = inlined_call_operand.hbm [shape: f32[2,8], index: 2, kind: output, shape index: {}]
  %s3 = sld [smem:[#allocation0]]
  $region18: #{attention_forward.1} parent=0
    _
  %s5 = ssub.s32 1, %s3
  %s6 = scalar_select 0, %s5, %s3
  $region1: #{attention_forward.1} parent=0
    #allocation2 [shape = 'u8[1024]{0}', space=vmem, size = 0x400, scoped, tag = 'output window, operand 0, single buffered']
    #allocation3 [shape = 's32[1]{0}', space=sflag, size = 0x4, scoped, tag = 'scoped memory for attention_forward.1']
    %7 = vsyncpa [#allocation3], 0
    // Predicated region
    $region2: #{attention_forward.1} parent=1 // pred_check
      _
    $region3: #{attention_forward.1} parent=1 // pred_check_branch
      %9 = sbr.rel (0) target = $region5
    $region4: #{attention_forward.1} parent=1 // pred_region
      _
    $region5: #{attention_forward.1} parent=1 // pred_fallthru
      _
    // Predicated region
    $region6: #{attention_forward.1} parent=1 // pred_check
      _
    $region7: #{attention_forward.1} parent=1 // pred_check_branch
      %11 = sbr.rel (0) target = $region9
    $region8: #{attention_forward.1} parent=1 // pred_region
      _
    $region9: #{attention_forward.1} parent=1 // pred_fallthru
      _
    %v12 = vld [vmem:[%s0] sm:$0xf]
    %v13 = vld [vmem:[%s0 + $0x4] sm:$0xf]
    %v14 = vunpack.c.l.bf16 %v12
    %v15 = vunpack.c.l.bf16 %v13
    %v16 = vld [vmem:[%s1] sm:$0x1]
    %v18 = vlaneseq
    %v19 = vshrl.u32 %v18, 7
    %v20 = vsub.s32 0, %v19
    %v21 = vrot.slane %v16, %v20
    %v23 = vmul.f32 %v14, %v21
    %v24 = vmul.f32 %v15, %v21
    %vm25 = vcmask 523264
    %v26 = vsel %vm25, %v23, 0.0
    %27 = vadd.xlane.f32.xlu0 %v26
    %v28 = vpop.xlane.xlu0 %27
    %v29 = vsel %vm25, %v24, 0.0
    %30 = vadd.xlane.f32.xlu0 %v29
    %v31 = vpop.xlane.xlu0 %30
    %v34 = vlaneseq
    %v35 = vand.u32 %v34, 127
    %v36 = vlaneseq
    %v37 = vshrl.u32 %v36, 7
    %v38 = vsub.s32 %v35, %v37
    %v39 = vrot.slane %v28, %v38
    %v40 = vlaneseq
    %v41 = vshrl.u32 %v40, 7
    %v42 = vsub.s32 %v35, %v41
    %v43 = vrot.slane %v31, %v42
    %vm44 = vcmask 1041409
    %v45 = vsel %vm44, %v43, %v39
    %vm47 = vcmask 58368
    %v48 = vsel %vm47, %v45, -inf
    %49 = vmax.xlane.f32.xlu0 %v48
    %v50 = vpop.xlane.xlu0 %49
    %v52 = vlaneseq
    %v53 = vshrl.u32 %v52, 7
    %v54 = vsub.s32 0, %v53
    %v55 = vrot.slane %v50, %v54
    %v56 = vlaneseq
    %v57 = vshrl.u32 %v56, 7
    %v58 = vsub.s32 1, %v57
    %v59 = vrot.slane %v50, %v58
    %v62 = vsub.f32 %v28, %v55
    %v63 = vsub.f32 %v31, %v59
    %v64 = vmul.f32 %v62, 1.442695
    %v65 = vpow.pop %v64
    %v66 = vmul.f32 %v63, 1.442695
    %v67 = vpow.pop %v66
    %70 = vset.pattern.permute.xlu0 0
    %71 = vperm.xlu0 %70, %v65
    %v72 = vpop.permute.xlu0 %71
    %73 = vset.pattern.permute.xlu0 0
    %74 = vperm.xlu0 %73, %v67
    %v75 = vpop.permute.xlu0 %74
    %v76 = vlaneseq
    %v77 = vshrl.u32 %v76, 7
    %v78 = vsub.s32 %v35, %v77
    %v79 = vrot.slane %v72, %v78
    %v80 = vlaneseq
    %v81 = vshrl.u32 %v80, 7
    %v82 = vsub.s32 %v35, %v81
    %v83 = vrot.slane %v75, %v82
    %v84 = vsel %vm44, %v83, %v79
    %v86 = vsel %vm47, %v84, 0.0
    %87 = vadd.xlane.f32.xlu0 %v86
    %v88 = vpop.xlane.xlu0 %87
    %v90 = vlaneseq
    %v91 = vshrl.u32 %v90, 7
    %v92 = vsub.s32 0, %v91
    %v93 = vrot.slane %v88, %v92
    %v94 = vlaneseq
    %v95 = vshrl.u32 %v94, 7
    %v96 = vsub.s32 1, %v95
    %v97 = vrot.slane %v88, %v96
    %v100 = vrcp.pop %v93
    %v101 = vmul.f32 %v65, %v100
    %v102 = vrcp.pop %v97
    %v103 = vmul.f32 %v67, %v102
    %106 = vset.pattern.permute.xlu0 0
    %107 = vperm.xlu0 %106, %v101
    %v108 = vpop.permute.xlu0 %107
    %109 = vset.pattern.permute.xlu0 0
    %110 = vperm.xlu0 %109, %v103
    %v111 = vpop.permute.xlu0 %110
    %v112 = vlaneseq
    %v113 = vshrl.u32 %v112, 7
    %v114 = vsub.s32 %v35, %v113
    %v115 = vrot.slane %v108, %v114
    %v116 = vlaneseq
    %v117 = vshrl.u32 %v116, 7
    %v118 = vsub.s32 %v35, %v117
    %v119 = vrot.slane %v111, %v118
    %v120 = vsel %vm44, %v119, %v115
    %122 = vst.msk [vmem:[#allocation2] sm:$0x3] %vm47, %v120
    // Predicated region
    $region10: #{attention_forward.1} parent=1 // pred_check
      _
    $region11: #{attention_forward.1} parent=1 // pred_check_branch
      %124 = sbr.rel (0) target = $region13
    $region12: #{attention_forward.1} parent=1 // pred_region
      %s126 = ssub.s32 32, 32
      %127 = vsyncadd [#allocation3], %s126
      %s129 = sshll.u32 [#allocation2], 4
      %s130 = int_to_ptr.vmem [resolvable:$true] %s129
      %132 = dma.vmem_to_hbm [thread:$0]  %s130, 32, %s2, [#allocation3]
    $region13: #{attention_forward.1} parent=1 // pred_fallthru
      _
    // Predicated region
    $region14: #{attention_forward.1} parent=1 // pred_check
      _
    $region15: #{attention_forward.1} parent=1 // pred_check_branch
      %134 = sbr.rel (0) target = $region17
    $region16: #{attention_forward.1} parent=1 // pred_region
      %135 = dma.done [#allocation3], 32
    $region17: #{attention_forward.1} parent=1 // pred_fallthru
      _
    %136 = vsyncpa [#allocation3], 1

</llo_original>
